<compile_context>
chip_gen: v5e
topology: v5e:2x2
jax: 0.10.0
libtpu: 0.0.40
codegen_flags: <defaults>
</compile_context>

<pallas_src>
import jax
import jax.numpy as jnp
from jax.experimental import pallas as pl
from jax.experimental.pallas import tpu as pltpu


def _boundless_rotated_kernel(base_ref, source_ref, rot_ref, rot_t_ref, mask_ref, out_ref):
    # base_ref/source_ref/out_ref: (TILE_ROWS, H) VMEM tiles (input dtype)
    # rot_ref/rot_t_ref:           (H, H) resident rotation matrix and its transpose (matmul dtype)
    # mask_ref:                    (1, H) resident sigmoid boundary mask (f32)
    base = base_ref[...]
    # Only the masked delta goes through the rotation: out = base + (m * ((src-base) @ R)) @ R^T.
    delta = (source_ref[...] - base).astype(rot_ref.dtype)
    d_rot = jnp.dot(delta, rot_ref[...], preferred_element_type=jnp.float32)      # MXU, f32 acc
    masked = (mask_ref[...] * d_rot).astype(rot_t_ref.dtype)                      # (1,H) broadcast
    upd = jnp.dot(masked, rot_t_ref[...], preferred_element_type=jnp.float32)     # MXU, f32 acc
    out_ref[...] = (base.astype(jnp.float32) + upd).astype(out_ref.dtype)


def _choose_tile_rows(rows, hidden, in_itemsize, resident_bytes, vmem_budget):
    """Pick an MXU-aligned row tile that fits the VMEM budget."""
    # Per-row VMEM: base/source/out tiles (double-buffered, input dtype) + f32 body temps.
    per_row = hidden * (3 * 2 * in_itemsize + 3 * 4)
    avail = vmem_budget - resident_bytes - (4 << 20)          # leave compiler-scratch slack
    max_by_vmem = max(avail // per_row, 8) if per_row > 0 else 8
    target = max((4 << 20) // max(hidden * in_itemsize, 1), 8)  # ~4 MiB input tiles
    tile = int(min(max_by_vmem, target, 2048))
    if tile >= 256:
        tile = (tile // 256) * 256        # MXU M-dim alignment (256-wide on v6e/v7x)
    else:
        tile = max(8, (tile // 8) * 8)    # sublane multiple
    rows_pad = ((rows + 7) // 8) * 8
    return int(max(8, min(tile, rows_pad)))


def boundless_rotated_space_intervention(
    base,
    source,
    rotation,
    intervention_boundary,
    temperature,
    *,
    matmul_dtype=jnp.bfloat16,
    tile_rows=None,
):
    """Pallas forward of BoundlessRotatedSpaceIntervention.

    base, source: [..., H]  (module forward uses [batch, H]; extra leading dims are flattened)
    rotation:     [H, H] orthogonal rotation matrix (rotate_layer.weight)
    intervention_boundary, temperature: scalars
    matmul_dtype: MXU operand dtype (bf16 by default; accumulation is always f32)
    """
    orig_shape = base.shape
    hidden = orig_shape[-1]
    assert rotation.shape == (hidden, hidden)
    assert source.shape == base.shape

    rows = 1
    for s in orig_shape[:-1]:
        rows *= s
    base2d = base.reshape(rows, hidden)
    src2d = source.reshape(rows, hidden)

    # Boundary mask (identical for every row): sigmoid_boundary(arange(H), 0, b*H, T).
    b = jnp.clip(jnp.asarray(intervention_boundary, jnp.float32), 0.001, 1.0)
    temp = jnp.asarray(temperature, jnp.float32)
    pop = jnp.arange(hidden, dtype=jnp.float32)
    mask2d = (jax.nn.sigmoid(pop / temp)
              * jax.nn.sigmoid((b * float(hidden) - pop) / temp)).reshape(1, hidden)

    # Rotation and its transpose, cast ONCE to the MXU operand dtype in the wrapper
    # (no per-tile in-kernel transpose, halved resident footprint with bf16).
    rot = rotation.astype(matmul_dtype)
    rot_t = rot.T

    in_itemsize = jnp.dtype(base.dtype).itemsize
    rot_itemsize = jnp.dtype(matmul_dtype).itemsize

    # Generation-aware VMEM budget (~0.85x capacity: ~110 MiB on v5e/v6e, ~56 MiB/TC on v7x).
    try:
        cap = int(pltpu.get_tpu_info().vmem_capacity_bytes)
    except Exception:
        cap = 64 * 1024 * 1024
    budget = int(0.85 * cap)

    def _run(single_buffer_resident):
        resident_mult = 1 if single_buffer_resident else 2
        resident = resident_mult * (2 * hidden * hidden * rot_itemsize + hidden * 4)
        t_rows = tile_rows if tile_rows is not None else _choose_tile_rows(
            rows, hidden, in_itemsize, resident, budget)

        tile_bytes = t_rows * hidden * in_itemsize
        need = (3 * 2 * tile_bytes              # base/source/out row tiles, double-buffered
                + 3 * t_rows * hidden * 4       # f32 intermediates in the body
                + resident                      # R, R^T, mask
                + (4 << 20))                    # compiler scratch slack
        vmem_limit = int(max(min(need, budget), 16 << 20))

        resident_kw = {"pipeline_mode": pl.Buffered(1)} if single_buffer_resident else {}
        grid = (pl.cdiv(rows, t_rows),)

        out2d = pl.pallas_call(
            _boundless_rotated_kernel,
            out_shape=jax.ShapeDtypeStruct((rows, hidden), base.dtype),
            grid=grid,
            in_specs=[
                pl.BlockSpec((t_rows, hidden), lambda i: (i, 0)),               # base rows
                pl.BlockSpec((t_rows, hidden), lambda i: (i, 0)),               # source rows
                pl.BlockSpec((hidden, hidden), lambda i: (0, 0), **resident_kw),  # R (resident)
                pl.BlockSpec((hidden, hidden), lambda i: (0, 0), **resident_kw),  # R^T (resident)
                pl.BlockSpec((1, hidden), lambda i: (0, 0), **resident_kw),       # boundary mask
            ],
            out_specs=pl.BlockSpec((t_rows, hidden), lambda i: (i, 0)),
            compiler_params=pltpu.CompilerParams(
                dimension_semantics=("parallel",),
                vmem_limit_bytes=vmem_limit,
            ),
        )(base2d, src2d, rot, rot_t, mask2d)
        return jax.block_until_ready(out2d)

    try:
        out2d = _run(True)
    except Exception:
        # Fallback for jax builds that reject pipeline_mode=pl.Buffered(1).
        out2d = _run(False)

    return out2d.reshape(orig_shape)


def _reference(base, source, rotation, intervention_boundary, temperature):
    """Pure-JAX replica of the original 3-matmul torch forward (f32)."""
    hidden = base.shape[-1]
    rb = base.astype(jnp.float32) @ rotation.astype(jnp.float32)
    rs = source.astype(jnp.float32) @ rotation.astype(jnp.float32)
    b = jnp.clip(jnp.asarray(intervention_boundary, jnp.float32), 0.001, 1.0)
    temp = jnp.asarray(temperature, jnp.float32)
    pop = jnp.arange(hidden, dtype=jnp.float32)
    mask = jax.nn.sigmoid(pop / temp) * jax.nn.sigmoid((b * hidden - pop) / temp)
    out = (1.0 - mask) * rb + mask * rs
    out = out @ rotation.astype(jnp.float32).T
    return out.astype(base.dtype)


if __name__ == "__main__":
    key = jax.random.PRNGKey(0)
    k_base, k_src, k_rot = jax.random.split(key, 3)

    batch, hidden = 8, 32  # module forward operates on [batch, embed_dim]
    base = jax.random.normal(k_base, (batch, hidden), dtype=jnp.float32)
    source = jax.random.normal(k_src, (batch, hidden), dtype=jnp.float32)

    # Orthogonal rotation (stand-in for torch.nn.utils.parametrizations.orthogonal weight).
    q, _ = jnp.linalg.qr(jax.random.normal(k_rot, (hidden, hidden), dtype=jnp.float32))
    rotation = q

    boundary = jnp.float32(0.5)      # intervention_boundaries init
    temperature = jnp.float32(50.0)  # temperature init

    ref = _reference(base, source, rotation, boundary, temperature)

    # Exact-precision path (f32 MXU operands): matches the 3-matmul reference up to the
    # ~1e-6 orthogonality residual of R (skip-connection rewrite relies on R @ R.T == I).
    out_f32 = boundless_rotated_space_intervention(
        base, source, rotation, boundary, temperature, matmul_dtype=jnp.float32)
    out_f32 = jax.block_until_ready(out_f32)
    assert out_f32.shape == base.shape
    err_f32 = float(jnp.max(jnp.abs(out_f32 - ref)))
    assert jnp.allclose(out_f32, ref, atol=1e-4, rtol=1e-4), err_f32

    # Default fast path (bf16 MXU operands, f32 accumulation).
    out_bf16 = boundless_rotated_space_intervention(
        base, source, rotation, boundary, temperature)
    out_bf16 = jax.block_until_ready(out_bf16)
    assert out_bf16.shape == base.shape
    err_bf16 = float(jnp.max(jnp.abs(out_bf16 - ref)))
    assert jnp.allclose(out_bf16, ref, atol=5e-2, rtol=5e-2), err_bf16

    print("KERNEL_OK")
</pallas_src>

<mosaic_0001>
module attributes {stable_mosaic.version = 11 : i64} {
  func.func @_boundless_rotated_kernel(%arg0: i32, %arg1: memref<8x32xf32, #tpu.memory_space<vmem>>, %arg2: memref<8x32xf32, #tpu.memory_space<vmem>>, %arg3: memref<32x32xf32, #tpu.memory_space<vmem>>, %arg4: memref<32x32xf32, #tpu.memory_space<vmem>>, %arg5: memref<1x32xf32, #tpu.memory_space<vmem>>, %arg6: memref<8x32xf32, #tpu.memory_space<vmem>>) attributes {dimension_semantics = [#tpu.dimension_semantics<parallel>], iteration_bounds = array<i64: 1>, scalar_prefetch = 0 : i64, scratch_operands = 0 : i64, tpu.core_type = #tpu.core_type<tc>, window_params = [{transform_indices = @transform_0, window_bounds = array<i64: 8, 32>}, {transform_indices = @transform_1, window_bounds = array<i64: 8, 32>}, {pipeline_mode = #tpu.pipeline_mode<synchronous>, transform_indices = @transform_2, window_bounds = array<i64: 32, 32>}, {pipeline_mode = #tpu.pipeline_mode<synchronous>, transform_indices = @transform_3, window_bounds = array<i64: 32, 32>}, {pipeline_mode = #tpu.pipeline_mode<synchronous>, transform_indices = @transform_4, window_bounds = array<i64: 1, 32>}, {transform_indices = @transform_5, window_bounds = array<i64: 8, 32>}]} {
    %c0 = arith.constant 0 : index
    %c0_0 = arith.constant 0 : index
    %0 = vector.load %arg1[%c0, %c0_0] : memref<8x32xf32, #tpu.memory_space<vmem>>, vector<8x32xf32>
    %c0_1 = arith.constant 0 : index
    %c0_2 = arith.constant 0 : index
    %1 = vector.load %arg2[%c0_1, %c0_2] : memref<8x32xf32, #tpu.memory_space<vmem>>, vector<8x32xf32>
    %2 = arith.subf %1, %0 : vector<8x32xf32>
    %c0_3 = arith.constant 0 : index
    %c0_4 = arith.constant 0 : index
    %3 = vector.load %arg3[%c0_3, %c0_4] : memref<32x32xf32, #tpu.memory_space<vmem>>, vector<32x32xf32>
    %cst = arith.constant dense<0.000000e+00> : vector<8x32xf32>
    %4 = tpu.matmul %2, %3, %cst {dimension_numbers = #tpu.dot_dimension_numbers<[1], [0], [0], [1], [0, 0, 1, 1], [], []>} : vector<8x32xf32>, vector<32x32xf32>, vector<8x32xf32> -> vector<8x32xf32>
    %c0_5 = arith.constant 0 : index
    %c0_6 = arith.constant 0 : index
    %5 = vector.load %arg5[%c0_5, %c0_6] : memref<1x32xf32, #tpu.memory_space<vmem>>, vector<1x32xf32>
    %6 = vector.broadcast %5 : vector<1x32xf32> to vector<8x32xf32>
    %7 = arith.mulf %6, %4 : vector<8x32xf32>
    %c0_7 = arith.constant 0 : index
    %c0_8 = arith.constant 0 : index
    %8 = vector.load %arg4[%c0_7, %c0_8] : memref<32x32xf32, #tpu.memory_space<vmem>>, vector<32x32xf32>
    %cst_9 = arith.constant dense<0.000000e+00> : vector<8x32xf32>
    %9 = tpu.matmul %7, %8, %cst_9 {dimension_numbers = #tpu.dot_dimension_numbers<[1], [0], [0], [1], [0, 0, 1, 1], [], []>} : vector<8x32xf32>, vector<32x32xf32>, vector<8x32xf32> -> vector<8x32xf32>
    %10 = arith.addf %0, %9 : vector<8x32xf32>
    %c0_10 = arith.constant 0 : index
    %c0_11 = arith.constant 0 : index
    %11 = vector.load %arg6[%c0_10, %c0_11] : memref<8x32xf32, #tpu.memory_space<vmem>>, vector<8x32xf32>
    tpu.vector_store %arg6[%c0_10, %c0_11], %10 {strides = array<i32>} : memref<8x32xf32, #tpu.memory_space<vmem>>, vector<8x32xf32>,
    return
  }
  func.func @transform_0(%arg0: i32) -> (i32, i32) {
    %c0_i32 = arith.constant 0 : i32
    %c0_i32_0 = arith.constant 0 : i32
    return %arg0, %c0_i32 : i32, i32
  }
  func.func @transform_1(%arg0: i32) -> (i32, i32) {
    %c0_i32 = arith.constant 0 : i32
    %c0_i32_0 = arith.constant 0 : i32
    return %arg0, %c0_i32 : i32, i32
  }
  func.func @transform_2(%arg0: i32) -> (i32, i32) {
    %c0_i32 = arith.constant 0 : i32
    %c0_i32_0 = arith.constant 0 : i32
    %c0_i32_1 = arith.constant 0 : i32
    return %c0_i32, %c0_i32_0 : i32, i32
  }
  func.func @transform_3(%arg0: i32) -> (i32, i32) {
    %c0_i32 = arith.constant 0 : i32
    %c0_i32_0 = arith.constant 0 : i32
    %c0_i32_1 = arith.constant 0 : i32
    return %c0_i32, %c0_i32_0 : i32, i32
  }
  func.func @transform_4(%arg0: i32) -> (i32, i32) {
    %c0_i32 = arith.constant 0 : i32
    %c0_i32_0 = arith.constant 0 : i32
    %c0_i32_1 = arith.constant 0 : i32
    return %c0_i32, %c0_i32_0 : i32, i32
  }
  func.func @transform_5(%arg0: i32) -> (i32, i32) {
    %c0_i32 = arith.constant 0 : i32
    %c0_i32_0 = arith.constant 0 : i32
    return %arg0, %c0_i32 : i32, i32
  }
}

module attributes {stable_mosaic.version = 11 : i64} {
  func.func @_boundless_rotated_kernel(%arg0: i32, %arg1: memref<8x32xf32, #tpu.memory_space<vmem>>, %arg2: memref<8x32xf32, #tpu.memory_space<vmem>>, %arg3: memref<32x32xf32, #tpu.memory_space<vmem>>, %arg4: memref<32x32xf32, #tpu.memory_space<vmem>>, %arg5: memref<1x32xf32, #tpu.memory_space<vmem>>, %arg6: memref<8x32xf32, #tpu.memory_space<vmem>>) attributes {dimension_semantics = [#tpu.dimension_semantics<parallel>], iteration_bounds = array<i64: 1>, scalar_prefetch = 0 : i64, scratch_operands = 0 : i64, tpu.core_type = #tpu.core_type<tc>, window_params = [{transform_indices = @transform_0, window_bounds = array<i64: 8, 32>}, {transform_indices = @transform_1, window_bounds = array<i64: 8, 32>}, {pipeline_mode = #tpu.pipeline_mode<synchronous>, transform_indices = @transform_2, window_bounds = array<i64: 32, 32>}, {pipeline_mode = #tpu.pipeline_mode<synchronous>, transform_indices = @transform_3, window_bounds = array<i64: 32, 32>}, {pipeline_mode = #tpu.pipeline_mode<synchronous>, transform_indices = @transform_4, window_bounds = array<i64: 1, 32>}, {transform_indices = @transform_5, window_bounds = array<i64: 8, 32>}]} {
    %c0 = arith.constant 0 : index
    %c0_0 = arith.constant 0 : index
    %0 = vector.load %arg1[%c0, %c0_0] : memref<8x32xf32, #tpu.memory_space<vmem>>, vector<8x32xf32>
    %c0_1 = arith.constant 0 : index
    %c0_2 = arith.constant 0 : index
    %1 = vector.load %arg2[%c0_1, %c0_2] : memref<8x32xf32, #tpu.memory_space<vmem>>, vector<8x32xf32>
    %2 = arith.subf %1, %0 : vector<8x32xf32>
    %c0_3 = arith.constant 0 : index
    %c0_4 = arith.constant 0 : index
    %3 = vector.load %arg3[%c0_3, %c0_4] : memref<32x32xf32, #tpu.memory_space<vmem>>, vector<32x32xf32>
    %cst = arith.constant dense<0.000000e+00> : vector<8x32xf32>
    %4 = tpu.matmul %2, %3, %cst {dimension_numbers = #tpu.dot_dimension_numbers<[1], [0], [0], [1], [0, 0, 1, 1], [], []>} : vector<8x32xf32>, vector<32x32xf32>, vector<8x32xf32> -> vector<8x32xf32>
    %c0_5 = arith.constant 0 : index
    %c0_6 = arith.constant 0 : index
    %5 = vector.load %arg5[%c0_5, %c0_6] : memref<1x32xf32, #tpu.memory_space<vmem>>, vector<1x32xf32>
    %6 = vector.broadcast %5 : vector<1x32xf32> to vector<8x32xf32>
    %7 = arith.mulf %6, %4 : vector<8x32xf32>
    %c0_7 = arith.constant 0 : index
    %c0_8 = arith.constant 0 : index
    %8 = vector.load %arg4[%c0_7, %c0_8] : memref<32x32xf32, #tpu.memory_space<vmem>>, vector<32x32xf32>
    %cst_9 = arith.constant dense<0.000000e+00> : vector<8x32xf32>
    %9 = tpu.matmul %7, %8, %cst_9 {dimension_numbers = #tpu.dot_dimension_numbers<[1], [0], [0], [1], [0, 0, 1, 1], [], []>} : vector<8x32xf32>, vector<32x32xf32>, vector<8x32xf32> -> vector<8x32xf32>
    %10 = arith.addf %0, %9 : vector<8x32xf32>
    %c0_10 = arith.constant 0 : index
    %c0_11 = arith.constant 0 : index
    %11 = vector.load %arg6[%c0_10, %c0_11] : memref<8x32xf32, #tpu.memory_space<vmem>>, vector<8x32xf32>
    tpu.vector_store %arg6[%c0_10, %c0_11], %10 {strides = array<i32>} : memref<8x32xf32, #tpu.memory_space<vmem>>, vector<8x32xf32>,
    return
  }
  func.func @transform_0(%arg0: i32) -> (i32, i32) {
    %c0_i32 = arith.constant 0 : i32
    %c0_i32_0 = arith.constant 0 : i32
    return %arg0, %c0_i32 : i32, i32
  }
  func.func @transform_1(%arg0: i32) -> (i32, i32) {
    %c0_i32 = arith.constant 0 : i32
    %c0_i32_0 = arith.constant 0 : i32
    return %arg0, %c0_i32 : i32, i32
  }
  func.func @transform_2(%arg0: i32) -> (i32, i32) {
    %c0_i32 = arith.constant 0 : i32
    %c0_i32_0 = arith.constant 0 : i32
    %c0_i32_1 = arith.constant 0 : i32
    return %c0_i32, %c0_i32_0 : i32, i32
  }
  func.func @transform_3(%arg0: i32) -> (i32, i32) {
    %c0_i32 = arith.constant 0 : i32
    %c0_i32_0 = arith.constant 0 : i32
    %c0_i32_1 = arith.constant 0 : i32
    return %c0_i32, %c0_i32_0 : i32, i32
  }
  func.func @transform_4(%arg0: i32) -> (i32, i32) {
    %c0_i32 = arith.constant 0 : i32
    %c0_i32_0 = arith.constant 0 : i32
    %c0_i32_1 = arith.constant 0 : i32
    return %c0_i32, %c0_i32_0 : i32, i32
  }
  func.func @transform_5(%arg0: i32) -> (i32, i32) {
    %c0_i32 = arith.constant 0 : i32
    %c0_i32_0 = arith.constant 0 : i32
    return %arg0, %c0_i32 : i32, i32
  }
}

</mosaic_0001>

<llo_original>
// kernel: tpu_custom_call.1
$region0: #{tpu_custom_call.1}
  #allocation0 [shape = 'u32[]', space=smem, size = 0x4, offset = 0x4, fixed_abs, tag = 'smem constant byte address 0x4 - core index']
  #allocation1 [shape = 'u32[72,128]{1,0:T(1,128)}', space=vmem, size = 0x9000, scoped, tag = 'internal scratch']
  %s0 = inlined_call_operand.hbm [shape: f32[8,32], index: 0, kind: input, shape index: {}]
  %s1 = inlined_call_operand.hbm [shape: f32[8,32], index: 1, kind: input, shape index: {}]
  %s2 = inlined_call_operand.hbm [shape: f32[32,32], index: 2, kind: input, shape index: {}]
  %s3 = inlined_call_operand.hbm [shape: f32[32,32], index: 3, kind: input, shape index: {}]
  %s4 = inlined_call_operand.vmem [shape: f32[1,32], index: 4, kind: input, shape index: {}]
  %s5 = inlined_call_operand.hbm [shape: f32[8,32], index: 5, kind: output, shape index: {}]
  %s6 = sld [smem:[#allocation0]]
  $region46: #{tpu_custom_call.1} parent=0
    _
  %s8 = ssub.s32 1, %s6
  %s9 = scalar_select 0, %s8, %s6
  $region1: #{tpu_custom_call.1} parent=0
    #allocation2 [shape = 'u8[4096]{0}', space=vmem, size = 0x1000, scoped, tag = 'input window, operand 0, single buffered']
    #allocation3 [shape = 's32[1]{0}', space=sflag, size = 0x4, scoped, tag = 'scoped memory for tpu_custom_call.1']
    #allocation4 [shape = 's32[1]{0}', space=sflag, size = 0x4, scoped, tag = 'scoped memory for tpu_custom_call.1']
    #allocation5 [shape = 'u8[4096]{0}', space=vmem, size = 0x1000, scoped, tag = 'input window, operand 1, single buffered']
    #allocation6 [shape = 's32[1]{0}', space=sflag, size = 0x4, scoped, tag = 'scoped memory for tpu_custom_call.1']
    #allocation7 [shape = 'u8[16384]{0}', space=vmem, size = 0x4000, scoped, tag = 'input window, operand 2, single buffered']
    #allocation8 [shape = 'u8[16384]{0}', space=vmem, size = 0x4000, scoped, tag = 'input window, operand 3, single buffered']
    #allocation9 [shape = 's32[1]{0}', space=sflag, size = 0x4, scoped, tag = 'scoped memory for tpu_custom_call.1']
    #allocation10 [shape = 'u8[4096]{0}', space=vmem, size = 0x1000, scoped, tag = 'output window, operand 0, single buffered']
    %10 = vsyncpa [#allocation3], 0
    %11 = vsyncpa [#allocation6], 0
    %12 = vsyncpa [#allocation9], 0
    %13 = vsyncpa [#allocation4], 0
    // Predicated region
    $region2: #{tpu_custom_call.1} parent=1 // pred_check
      _
    $region3: #{tpu_custom_call.1} parent=1 // pred_check_branch
      %15 = sbr.rel (0) target = $region5
    $region4: #{tpu_custom_call.1} parent=1 // pred_region
      %17 = vsyncadd [#allocation3], 0
      %s19 = sshll.u32 %s0, 4
      %s20 = int_to_ptr.hbm [resolvable:$true] %s19
      %s21 = sshll.u32 [#allocation2], 4
      %s22 = int_to_ptr.vmem [resolvable:$true] %s21
      %24 = dma.hbm_to_vmem [thread:$0]  %s20, 128, %s22, [#allocation3]
    $region5: #{tpu_custom_call.1} parent=1 // pred_fallthru
      _
    // Predicated region
    $region6: #{tpu_custom_call.1} parent=1 // pred_check
      _
    $region7: #{tpu_custom_call.1} parent=1 // pred_check_branch
      %26 = sbr.rel (0) target = $region9
    $region8: #{tpu_custom_call.1} parent=1 // pred_region
      %28 = vsyncadd [#allocation6], 0
      %s30 = sshll.u32 %s1, 4
      %s31 = int_to_ptr.hbm [resolvable:$true] %s30
      %s32 = sshll.u32 [#allocation5], 4
      %s33 = int_to_ptr.vmem [resolvable:$true] %s32
      %35 = dma.hbm_to_vmem [thread:$0]  %s31, 128, %s33, [#allocation6]
    $region9: #{tpu_custom_call.1} parent=1 // pred_fallthru
      _
    // Predicated region
    $region10: #{tpu_custom_call.1} parent=1 // pred_check
      _
    $region11: #{tpu_custom_call.1} parent=1 // pred_check_branch
      %37 = sbr.rel (0) target = $region13
    $region12: #{tpu_custom_call.1} parent=1 // pred_region
      %39 = vsyncadd [#allocation6], 0
      %s40 = sshll.u32 %s2, 4
      %s41 = int_to_ptr.hbm [resolvable:$true] %s40
      %s42 = sshll.u32 [#allocation7], 4
      %s43 = int_to_ptr.vmem [resolvable:$true] %s42
      %48 = dma.hbm_to_vmem [thread:$0]  %s41, 512, %s43, [#allocation6], 128, 128, 8
    $region13: #{tpu_custom_call.1} parent=1 // pred_fallthru
      _
    // Predicated region
    $region14: #{tpu_custom_call.1} parent=1 // pred_check
      _
    $region15: #{tpu_custom_call.1} parent=1 // pred_check_branch
      %50 = sbr.rel (0) target = $region17
    $region16: #{tpu_custom_call.1} parent=1 // pred_region
      %52 = vsyncadd [#allocation9], 0
      %s53 = sshll.u32 %s3, 4
      %s54 = int_to_ptr.hbm [resolvable:$true] %s53
      %s55 = sshll.u32 [#allocation8], 4
      %s56 = int_to_ptr.vmem [resolvable:$true] %s55
      %61 = dma.hbm_to_vmem [thread:$0]  %s54, 512, %s56, [#allocation9], 128, 128, 8
    $region17: #{tpu_custom_call.1} parent=1 // pred_fallthru
      _
    // Predicated region
    $region18: #{tpu_custom_call.1} parent=1 // pred_check
      _
    $region19: #{tpu_custom_call.1} parent=1 // pred_check_branch
      %63 = sbr.rel (0) target = $region21
    $region20: #{tpu_custom_call.1} parent=1 // pred_region
      _
    $region21: #{tpu_custom_call.1} parent=1 // pred_fallthru
      _
    // Predicated region
    $region22: #{tpu_custom_call.1} parent=1 // pred_check
      _
    $region23: #{tpu_custom_call.1} parent=1 // pred_check_branch
      %65 = sbr.rel (0) target = $region25
    $region24: #{tpu_custom_call.1} parent=1 // pred_region
      %67 = dma.done [#allocation3], 128
    $region25: #{tpu_custom_call.1} parent=1 // pred_fallthru
      _
    // Predicated region
    $region26: #{tpu_custom_call.1} parent=1 // pred_check
      _
    $region27: #{tpu_custom_call.1} parent=1 // pred_check_branch
      %69 = sbr.rel (0) target = $region29
    $region28: #{tpu_custom_call.1} parent=1 // pred_region
      %71 = dma.done [#allocation6], 128
    $region29: #{tpu_custom_call.1} parent=1 // pred_fallthru
      _
    // Predicated region
    $region30: #{tpu_custom_call.1} parent=1 // pred_check
      _
    $region31: #{tpu_custom_call.1} parent=1 // pred_check_branch
      %73 = sbr.rel (0) target = $region33
    $region32: #{tpu_custom_call.1} parent=1 // pred_region
      %75 = dma.done [#allocation6], 512
    $region33: #{tpu_custom_call.1} parent=1 // pred_fallthru
      _
    // Predicated region
    $region34: #{tpu_custom_call.1} parent=1 // pred_check
      _
    $region35: #{tpu_custom_call.1} parent=1 // pred_check_branch
      %77 = sbr.rel (0) target = $region37
    $region36: #{tpu_custom_call.1} parent=1 // pred_region
      %79 = dma.done [#allocation9], 512
    $region37: #{tpu_custom_call.1} parent=1 // pred_fallthru
      _
    %v80 = vld [vmem:[#allocation2] sm:$0xff]
    %v81 = vld [vmem:[#allocation5] sm:$0xff]
    %v82 = vsub.f32 %v81, %v80
    %v83 = vld [vmem:[#allocation7] sm:$0xff]
    %v84 = vld [vmem:[#allocation7 + $0x8] sm:$0xff]
    %v85 = vld [vmem:[#allocation7 + $0x10] sm:$0xff]
    %v86 = vld [vmem:[#allocation7 + $0x18] sm:$0xff]
    %vm87 = vcmask 261120
    %v89 = vsel %vm87, %v82, 0
    %91 = vmatpush.msra.mxu0 0.0
    %92 = vmatpush.msra.mxu0 0.0
    %93 = vmatpush.msra.mxu0 0.0
    %94 = vmatpush.msra.mxu0 0.0
    %95 = vmatpush.msra.mxu0 0.0
    %96 = vmatpush.msra.mxu0 0.0
    %97 = vmatpush.msra.mxu0 0.0
    %98 = vmatpush.msra.mxu0 0.0
    %99 = vmatpush.msra.mxu0 0.0
    %100 = vmatpush.msra.mxu0 0.0
    %101 = vmatpush.msra.mxu0 0.0
    %102 = vmatpush.msra.mxu0 0.0
    %103 = vmatpush.msra.mxu0 %v86
    %104 = vmatpush.msra.mxu0 %v85
    %105 = vmatpush.msra.mxu0 %v84
    %106 = vmatpush.msra.mxu0 %v83
    %107 = vmatmul.f32.gmra.mxu0 %v89
    %v108 = vpop.f32.mrf.mxu0
    %v109 = vadd.f32 0.0, %v108
    %110 = vdwg.mxu0
    %v111 = vld [vmem:[%s4] sm:$0x1]
    %v113 = vperm.slane %v111, 0
    %v115 = vmul.f32 %v113, %v109
    %v116 = vld [vmem:[#allocation8] sm:$0xff]
    %v117 = vld [vmem:[#allocation8 + $0x8] sm:$0xff]
    %v118 = vld [vmem:[#allocation8 + $0x10] sm:$0xff]
    %v119 = vld [vmem:[#allocation8 + $0x18] sm:$0xff]
    %v121 = vsel %vm87, %v115, 0
    %123 = vmatpush.msra.mxu0 0.0
    %124 = vmatpush.msra.mxu0 0.0
    %125 = vmatpush.msra.mxu0 0.0
    %126 = vmatpush.msra.mxu0 0.0
    %127 = vmatpush.msra.mxu0 0.0
    %128 = vmatpush.msra.mxu0 0.0
    %129 = vmatpush.msra.mxu0 0.0
    %130 = vmatpush.msra.mxu0 0.0
    %131 = vmatpush.msra.mxu0 0.0
    %132 = vmatpush.msra.mxu0 0.0
    %133 = vmatpush.msra.mxu0 0.0
    %134 = vmatpush.msra.mxu0 0.0
    %135 = vmatpush.msra.mxu0 %v119
    %136 = vmatpush.msra.mxu0 %v118
    %137 = vmatpush.msra.mxu0 %v117
    %138 = vmatpush.msra.mxu0 %v116
    %139 = vmatmul.f32.gmra.mxu0 %v121
    %v140 = vpop.f32.mrf.mxu0
    %v141 = vadd.f32 0.0, %v140
    %142 = vdwg.mxu0
    %v143 = vadd.f32 %v80, %v141
    %144 = vst.msk [vmem:[#allocation10] sm:$0xff] %vm87, %v143
    // Predicated region
    $region38: #{tpu_custom_call.1} parent=1 // pred_check
      _
    $region39: #{tpu_custom_call.1} parent=1 // pred_check_branch
      %146 = sbr.rel (0) target = $region41
    $region40: #{tpu_custom_call.1} parent=1 // pred_region
      %148 = vsyncadd [#allocation4], 0
      %s150 = sshll.u32 [#allocation10], 4
      %s151 = int_to_ptr.vmem [resolvable:$true] %s150
      %s152 = sshll.u32 %s5, 4
      %s153 = int_to_ptr.hbm [resolvable:$true] %s152
      %155 = dma.vmem_to_hbm [thread:$0]  %s151, 128, %s153, [#allocation4]
    $region41: #{tpu_custom_call.1} parent=1 // pred_fallthru
      _
    // Predicated region
    $region42: #{tpu_custom_call.1} parent=1 // pred_check
      _
    $region43: #{tpu_custom_call.1} parent=1 // pred_check_branch
      %157 = sbr.rel (0) target = $region45
    $region44: #{tpu_custom_call.1} parent=1 // pred_region
      %159 = dma.done [#allocation4], 128
    $region45: #{tpu_custom_call.1} parent=1 // pred_fallthru
      _
    %160 = vsyncpa [#allocation3], 1
    %161 = vsyncpa [#allocation6], 1
    %162 = vsyncpa [#allocation9], 1
    %163 = vsyncpa [#allocation4], 1

// kernel: tpu_custom_call.1
$region0: #{tpu_custom_call.1}
  #allocation0 [shape = 'u32[]', space=smem, size = 0x4, offset = 0x4, fixed_abs, tag = 'smem constant byte address 0x4 - core index']
  #allocation1 [shape = 'u32[72,128]{1,0:T(1,128)}', space=vmem, size = 0x9000, scoped, tag = 'internal scratch']
  %s0 = inlined_call_operand.hbm [shape: f32[8,32], index: 0, kind: input, shape index: {}]
  %s1 = inlined_call_operand.hbm [shape: f32[8,32], index: 1, kind: input, shape index: {}]
  %s2 = inlined_call_operand.hbm [shape: f32[32,32], index: 2, kind: input, shape index: {}]
  %s3 = inlined_call_operand.hbm [shape: f32[32,32], index: 3, kind: input, shape index: {}]
  %s4 = inlined_call_operand.vmem [shape: f32[1,32], index: 4, kind: input, shape index: {}]
  %s5 = inlined_call_operand.hbm [shape: f32[8,32], index: 5, kind: output, shape index: {}]
  %s6 = sld [smem:[#allocation0]]
  $region46: #{tpu_custom_call.1} parent=0
    _
  %s8 = ssub.s32 1, %s6
  %s9 = scalar_select 0, %s8, %s6
  $region1: #{tpu_custom_call.1} parent=0
    #allocation2 [shape = 'u8[4096]{0}', space=vmem, size = 0x1000, scoped, tag = 'input window, operand 0, single buffered']
    #allocation3 [shape = 's32[1]{0}', space=sflag, size = 0x4, scoped, tag = 'scoped memory for tpu_custom_call.1']
    #allocation4 [shape = 's32[1]{0}', space=sflag, size = 0x4, scoped, tag = 'scoped memory for tpu_custom_call.1']
    #allocation5 [shape = 'u8[4096]{0}', space=vmem, size = 0x1000, scoped, tag = 'input window, operand 1, single buffered']
    #allocation6 [shape = 's32[1]{0}', space=sflag, size = 0x4, scoped, tag = 'scoped memory for tpu_custom_call.1']
    #allocation7 [shape = 'u8[16384]{0}', space=vmem, size = 0x4000, scoped, tag = 'input window, operand 2, single buffered']
    #allocation8 [shape = 'u8[16384]{0}', space=vmem, size = 0x4000, scoped, tag = 'input window, operand 3, single buffered']
    #allocation9 [shape = 's32[1]{0}', space=sflag, size = 0x4, scoped, tag = 'scoped memory for tpu_custom_call.1']
    #allocation10 [shape = 'u8[4096]{0}', space=vmem, size = 0x1000, scoped, tag = 'output window, operand 0, single buffered']
    %10 = vsyncpa [#allocation3], 0
    %11 = vsyncpa [#allocation6], 0
    %12 = vsyncpa [#allocation9], 0
    %13 = vsyncpa [#allocation4], 0
    // Predicated region
    $region2: #{tpu_custom_call.1} parent=1 // pred_check
      _
    $region3: #{tpu_custom_call.1} parent=1 // pred_check_branch
      %15 = sbr.rel (0) target = $region5
    $region4: #{tpu_custom_call.1} parent=1 // pred_region
      %17 = vsyncadd [#allocation3], 0
      %s19 = sshll.u32 %s0, 4
      %s20 = int_to_ptr.hbm [resolvable:$true] %s19
      %s21 = sshll.u32 [#allocation2], 4
      %s22 = int_to_ptr.vmem [resolvable:$true] %s21
      %24 = dma.hbm_to_vmem [thread:$0]  %s20, 128, %s22, [#allocation3]
    $region5: #{tpu_custom_call.1} parent=1 // pred_fallthru
      _
    // Predicated region
    $region6: #{tpu_custom_call.1} parent=1 // pred_check
      _
    $region7: #{tpu_custom_call.1} parent=1 // pred_check_branch
      %26 = sbr.rel (0) target = $region9
    $region8: #{tpu_custom_call.1} parent=1 // pred_region
      %28 = vsyncadd [#allocation6], 0
      %s30 = sshll.u32 %s1, 4
      %s31 = int_to_ptr.hbm [resolvable:$true] %s30
      %s32 = sshll.u32 [#allocation5], 4
      %s33 = int_to_ptr.vmem [resolvable:$true] %s32
      %35 = dma.hbm_to_vmem [thread:$0]  %s31, 128, %s33, [#allocation6]
    $region9: #{tpu_custom_call.1} parent=1 // pred_fallthru
      _
    // Predicated region
    $region10: #{tpu_custom_call.1} parent=1 // pred_check
      _
    $region11: #{tpu_custom_call.1} parent=1 // pred_check_branch
      %37 = sbr.rel (0) target = $region13
    $region12: #{tpu_custom_call.1} parent=1 // pred_region
      %39 = vsyncadd [#allocation6], 0
      %s40 = sshll.u32 %s2, 4
      %s41 = int_to_ptr.hbm [resolvable:$true] %s40
      %s42 = sshll.u32 [#allocation7], 4
      %s43 = int_to_ptr.vmem [resolvable:$true] %s42
      %48 = dma.hbm_to_vmem [thread:$0]  %s41, 512, %s43, [#allocation6], 128, 128, 8
    $region13: #{tpu_custom_call.1} parent=1 // pred_fallthru
      _
    // Predicated region
    $region14: #{tpu_custom_call.1} parent=1 // pred_check
      _
    $region15: #{tpu_custom_call.1} parent=1 // pred_check_branch
      %50 = sbr.rel (0) target = $region17
    $region16: #{tpu_custom_call.1} parent=1 // pred_region
      %52 = vsyncadd [#allocation9], 0
      %s53 = sshll.u32 %s3, 4
      %s54 = int_to_ptr.hbm [resolvable:$true] %s53
      %s55 = sshll.u32 [#allocation8], 4
      %s56 = int_to_ptr.vmem [resolvable:$true] %s55
      %61 = dma.hbm_to_vmem [thread:$0]  %s54, 512, %s56, [#allocation9], 128, 128, 8
    $region17: #{tpu_custom_call.1} parent=1 // pred_fallthru
      _
    // Predicated region
    $region18: #{tpu_custom_call.1} parent=1 // pred_check
      _
    $region19: #{tpu_custom_call.1} parent=1 // pred_check_branch
      %63 = sbr.rel (0) target = $region21
    $region20: #{tpu_custom_call.1} parent=1 // pred_region
      _
    $region21: #{tpu_custom_call.1} parent=1 // pred_fallthru
      _
    // Predicated region
    $region22: #{tpu_custom_call.1} parent=1 // pred_check
      _
    $region23: #{tpu_custom_call.1} parent=1 // pred_check_branch
      %65 = sbr.rel (0) target = $region25
    $region24: #{tpu_custom_call.1} parent=1 // pred_region
      %67 = dma.done [#allocation3], 128
    $region25: #{tpu_custom_call.1} parent=1 // pred_fallthru
      _
    // Predicated region
    $region26: #{tpu_custom_call.1} parent=1 // pred_check
      _
    $region27: #{tpu_custom_call.1} parent=1 // pred_check_branch
      %69 = sbr.rel (0) target = $region29
    $region28: #{tpu_custom_call.1} parent=1 // pred_region
      %71 = dma.done [#allocation6], 128
    $region29: #{tpu_custom_call.1} parent=1 // pred_fallthru
      _
    // Predicated region
    $region30: #{tpu_custom_call.1} parent=1 // pred_check
      _
    $region31: #{tpu_custom_call.1} parent=1 // pred_check_branch
      %73 = sbr.rel (0) target = $region33
    $region32: #{tpu_custom_call.1} parent=1 // pred_region
      %75 = dma.done [#allocation6], 512
    $region33: #{tpu_custom_call.1} parent=1 // pred_fallthru
      _
    // Predicated region
    $region34: #{tpu_custom_call.1} parent=1 // pred_check
      _
    $region35: #{tpu_custom_call.1} parent=1 // pred_check_branch
      %77 = sbr.rel (0) target = $region37
    $region36: #{tpu_custom_call.1} parent=1 // pred_region
      %79 = dma.done [#allocation9], 512
    $region37: #{tpu_custom_call.1} parent=1 // pred_fallthru
      _
    %v80 = vld [vmem:[#allocation2] sm:$0xff]
    %v81 = vld [vmem:[#allocation5] sm:$0xff]
    %v82 = vsub.f32 %v81, %v80
    %v83 = vld [vmem:[#allocation7] sm:$0xff]
    %v84 = vld [vmem:[#allocation7 + $0x8] sm:$0xff]
    %v85 = vld [vmem:[#allocation7 + $0x10] sm:$0xff]
    %v86 = vld [vmem:[#allocation7 + $0x18] sm:$0xff]
    %vm87 = vcmask 261120
    %v89 = vsel %vm87, %v82, 0
    %91 = vmatpush.msra.mxu0 0.0
    %92 = vmatpush.msra.mxu0 0.0
    %93 = vmatpush.msra.mxu0 0.0
    %94 = vmatpush.msra.mxu0 0.0
    %95 = vmatpush.msra.mxu0 0.0
    %96 = vmatpush.msra.mxu0 0.0
    %97 = vmatpush.msra.mxu0 0.0
    %98 = vmatpush.msra.mxu0 0.0
    %99 = vmatpush.msra.mxu0 0.0
    %100 = vmatpush.msra.mxu0 0.0
    %101 = vmatpush.msra.mxu0 0.0
    %102 = vmatpush.msra.mxu0 0.0
    %103 = vmatpush.msra.mxu0 %v86
    %104 = vmatpush.msra.mxu0 %v85
    %105 = vmatpush.msra.mxu0 %v84
    %106 = vmatpush.msra.mxu0 %v83
    %107 = vmatmul.f32.gmra.mxu0 %v89
    %v108 = vpop.f32.mrf.mxu0
    %v109 = vadd.f32 0.0, %v108
    %110 = vdwg.mxu0
    %v111 = vld [vmem:[%s4] sm:$0x1]
    %v113 = vperm.slane %v111, 0
    %v115 = vmul.f32 %v113, %v109
    %v116 = vld [vmem:[#allocation8] sm:$0xff]
    %v117 = vld [vmem:[#allocation8 + $0x8] sm:$0xff]
    %v118 = vld [vmem:[#allocation8 + $0x10] sm:$0xff]
    %v119 = vld [vmem:[#allocation8 + $0x18] sm:$0xff]
    %v121 = vsel %vm87, %v115, 0
    %123 = vmatpush.msra.mxu0 0.0
    %124 = vmatpush.msra.mxu0 0.0
    %125 = vmatpush.msra.mxu0 0.0
    %126 = vmatpush.msra.mxu0 0.0
    %127 = vmatpush.msra.mxu0 0.0
    %128 = vmatpush.msra.mxu0 0.0
    %129 = vmatpush.msra.mxu0 0.0
    %130 = vmatpush.msra.mxu0 0.0
    %131 = vmatpush.msra.mxu0 0.0
    %132 = vmatpush.msra.mxu0 0.0
    %133 = vmatpush.msra.mxu0 0.0
    %134 = vmatpush.msra.mxu0 0.0
    %135 = vmatpush.msra.mxu0 %v119
    %136 = vmatpush.msra.mxu0 %v118
    %137 = vmatpush.msra.mxu0 %v117
    %138 = vmatpush.msra.mxu0 %v116
    %139 = vmatmul.f32.gmra.mxu0 %v121
    %v140 = vpop.f32.mrf.mxu0
    %v141 = vadd.f32 0.0, %v140
    %142 = vdwg.mxu0
    %v143 = vadd.f32 %v80, %v141
    %144 = vst.msk [vmem:[#allocation10] sm:$0xff] %vm87, %v143
    // Predicated region
    $region38: #{tpu_custom_call.1} parent=1 // pred_check
      _
    $region39: #{tpu_custom_call.1} parent=1 // pred_check_branch
      %146 = sbr.rel (0) target = $region41
    $region40: #{tpu_custom_call.1} parent=1 // pred_region
      %148 = vsyncadd [#allocation4], 0
      %s150 = sshll.u32 [#allocation10], 4
      %s151 = int_to_ptr.vmem [resolvable:$true] %s150
      %s152 = sshll.u32 %s5, 4
      %s153 = int_to_ptr.hbm [resolvable:$true] %s152
      %155 = dma.vmem_to_hbm [thread:$0]  %s151, 128, %s153, [#allocation4]
    $region41: #{tpu_custom_call.1} parent=1 // pred_fallthru
      _
    // Predicated region
    $region42: #{tpu_custom_call.1} parent=1 // pred_check
      _
    $region43: #{tpu_custom_call.1} parent=1 // pred_check_branch
      %157 = sbr.rel (0) target = $region45
    $region44: #{tpu_custom_call.1} parent=1 // pred_region
      %159 = dma.done [#allocation4], 128
    $region45: #{tpu_custom_call.1} parent=1 // pred_fallthru
      _
    %160 = vsyncpa [#allocation3], 1
    %161 = vsyncpa [#allocation6], 1
    %162 = vsyncpa [#allocation9], 1
    %163 = vsyncpa [#allocation4], 1

</llo_original>
